<compile_context>
chip_gen: v7x
topology: tpu7x:2x2x1
jax: 0.10.0
libtpu: 0.0.40
codegen_flags: <defaults>
</compile_context>

<pallas_src>
import functools

import jax
import jax.numpy as jnp
from jax import lax
from jax.experimental import pallas as pl
from jax.experimental.pallas import tpu as pltpu


_VMEM_LIMIT_BYTES = 48 * 1024 * 1024   # explicit scoped-VMEM limit (all gens)
_VMEM_BUDGET_BYTES = 30 * 1024 * 1024  # target estimated usage (headroom to limit)
_TARGET_TILE_BYTES = 3 * 1024 * 1024   # ~3 MiB preds tile per grid step


def _round_up(x, m):
    return ((x + m - 1) // m) * m


def _auto_tile_n(c, in_itemsize):
    """Rows per grid step: byte-targeted, clamped by a VMEM usage estimate."""
    bytes_per_row_in = c * in_itemsize
    # Per-row VMEM estimate:
    #   2x double-buffered preds input tile (native dtype)
    # + ~6 whole-tile f32/i32 temporaries (x, x-m, e1, p, exp(p), iota/where)
    # + 2x double-buffered labels column, lane-padded to 128 lanes (512 B/row).
    per_row_vmem = 2 * bytes_per_row_in + 6 * c * 4 + 2 * 512
    tile_from_bytes = _TARGET_TILE_BYTES // max(bytes_per_row_in, 1)
    tile_from_vmem = _VMEM_BUDGET_BYTES // max(per_row_vmem, 1)
    tile_n = max(8, min(tile_from_bytes, tile_from_vmem))
    return max(8, (tile_n // 8) * 8)


def _cross_entropy_kernel(preds_ref, labels_ref, out_ref, *, total_n, tile_n):
    i = pl.program_id(0)
    x = preds_ref[...].astype(jnp.float32)               # (tile_n, C) f32
    tn, c = x.shape

    # ---- softmax over the class axis (PyTorch dim=1 == lane axis here) ----
    m1 = jnp.max(x, axis=1, keepdims=True)                # XLU lane reduce
    e1 = jnp.exp(x - m1)                                  # EUP
    s1 = jnp.sum(e1, axis=1, keepdims=True)               # XLU lane reduce
    p = e1 * pl.reciprocal(s1, approx=False)              # exact recip (1e-5 tol)

    # ---- cross_entropy(p, labels) = logsumexp(p) - p[label], per row ----
    # p is in (0, 1], so this logsumexp needs no extra max shift.
    lse = jnp.log(jnp.sum(jnp.exp(p), axis=1, keepdims=True))        # (tile_n, 1)

    col = lax.broadcasted_iota(jnp.int32, (tn, c), 1)
    picked = jnp.sum(jnp.where(col == labels_ref[...], p, 0.0),
                     axis=1, keepdims=True)                          # (tile_n, 1)

    per_row = lse - picked                                           # (tile_n, 1)

    # Mask rows beyond the original (unpadded) batch size.
    row_id = i * tile_n + lax.broadcasted_iota(jnp.int32, (tn, 1), 0)
    per_row = jnp.where(row_id < total_n, per_row, 0.0)

    # Lane-dense per-tile partial sum broadcast into the (1, 8, 128) out block.
    out_ref[...] = jnp.broadcast_to(jnp.sum(per_row), out_ref.shape)


def cross_entropy(preds, labels, *, tile_n=None):
    """F.cross_entropy(preds.softmax(dim=1), labels), 'mean' reduction.

    preds: (N, C) float array (f32 or bf16 -- kept in its native dtype for the
    HBM->VMEM tiles, upcast to f32 inside the kernel).
    labels: (N,) integer class indices.  Returns a scalar f32 loss.
    """
    n, c = preds.shape
    labels = labels.astype(jnp.int32).reshape(n, 1)
    in_itemsize = preds.dtype.itemsize

    if tile_n is None:
        tile_n = _auto_tile_n(c, in_itemsize)
    tile_n = max(8, (tile_n // 8) * 8)
    tile_n = min(tile_n, _round_up(n, 8))

    n_pad = _round_up(n, tile_n)
    if n_pad != n:
        preds = jnp.pad(preds, ((0, n_pad - n), (0, 0)))
        labels = jnp.pad(labels, ((0, n_pad - n), (0, 0)))
    num_tiles = n_pad // tile_n

    # TODO(synk): switch labels to a lane-dense (1, tile_n) block + one in-kernel
    # XLU transpose to drop the lane-padded labels VMEM (HBM traffic is identical;
    # the padded footprint is already included in the tile-size budget above).
    # TODO(synk): for vocab-scale C, add a 2-D grid with a streaming (online)
    # logsumexp over class chunks instead of loading a full (tile_n, C) block.

    kernel = functools.partial(_cross_entropy_kernel, total_n=n, tile_n=tile_n)
    cost = pl.CostEstimate(
        flops=8 * n_pad * c,                         # sub/mul/cmp/select/reduces
        transcendentals=2 * n_pad * c + 2 * n_pad,   # two exp per element + log/recip
        bytes_accessed=(n_pad * c * in_itemsize + n_pad * 4
                        + num_tiles * 8 * 128 * 4),
    )
    partial_sums = pl.pallas_call(
        kernel,
        out_shape=jax.ShapeDtypeStruct((num_tiles, 8, 128), jnp.float32),
        grid=(num_tiles,),
        in_specs=[
            pl.BlockSpec((tile_n, c), lambda i: (i, 0)),    # preds row tile
            pl.BlockSpec((tile_n, 1), lambda i: (i, 0)),    # labels column tile
        ],
        out_specs=pl.BlockSpec((1, 8, 128), lambda i: (i, 0, 0)),
        compiler_params=pltpu.CompilerParams(
            dimension_semantics=("parallel",),
            vmem_limit_bytes=_VMEM_LIMIT_BYTES),
        cost_estimate=cost,
    )(preds, labels)

    # Hierarchical mean: lane-dense per-tile sums from the kernel, final reduce here.
    return partial_sums[:, 0, 0].sum() / jnp.float32(n)


if __name__ == "__main__":
    key = jax.random.PRNGKey(0)
    k1, k2, k3, k4, k5, k6 = jax.random.split(key, 6)

    def reference(preds, labels):
        # Same math as F.cross_entropy(preds.softmax(1), labels), 'mean' reduction.
        p = jax.nn.softmax(preds.astype(jnp.float32), axis=1)
        logp = jax.nn.log_softmax(p, axis=1)
        return -jnp.mean(logp[jnp.arange(preds.shape[0]), labels])

    # Small demo shape (single tile).
    N, C = 8, 32
    preds = jax.random.normal(k1, (N, C), dtype=jnp.float32)
    labels = jax.random.randint(k2, (N,), 0, C, dtype=jnp.int32)
    loss = cross_entropy(preds, labels)
    jax.block_until_ready(loss)
    ref = reference(preds, labels)
    assert jnp.allclose(loss, ref, atol=1e-5, rtol=1e-5), (loss, ref)

    # Multi-tile path with a ragged last tile (exercises grid, padding, masking).
    N2, C2 = 200, 160
    preds2 = jax.random.normal(k3, (N2, C2), dtype=jnp.float32)
    labels2 = jax.random.randint(k4, (N2,), 0, C2, dtype=jnp.int32)
    loss2 = cross_entropy(preds2, labels2, tile_n=64)
    jax.block_until_ready(loss2)
    ref2 = reference(preds2, labels2)
    assert jnp.allclose(loss2, ref2, atol=1e-5, rtol=1e-5), (loss2, ref2)

    # bf16 inputs (exercises dtype-aware tile sizing and the in-kernel f32 upcast).
    N3, C3 = 128, 96
    preds3 = jax.random.normal(k5, (N3, C3), dtype=jnp.bfloat16)
    labels3 = jax.random.randint(k6, (N3,), 0, C3, dtype=jnp.int32)
    loss3 = cross_entropy(preds3, labels3)
    jax.block_until_ready(loss3)
    ref3 = reference(preds3, labels3)
    assert jnp.allclose(loss3, ref3, atol=1e-4, rtol=1e-4), (loss3, ref3)

    print("KERNEL_OK")
</pallas_src>

<mosaic_0001>
module attributes {stable_mosaic.version = 11 : i64} {
  func.func @_cross_entropy_kernel(%arg0: i32, %arg1: memref<8x32xf32, #tpu.memory_space<vmem>>, %arg2: memref<8x1xi32, #tpu.memory_space<vmem>>, %arg3: memref<1x8x128xf32, #tpu.memory_space<vmem>>) attributes {dimension_semantics = [#tpu.dimension_semantics<parallel>], iteration_bounds = array<i64: 1>, scalar_prefetch = 0 : i64, scratch_operands = 0 : i64, tpu.core_type = #tpu.core_type<tc>, window_params = [{transform_indices = @transform_0, window_bounds = array<i64: 8, 32>}, {transform_indices = @transform_1, window_bounds = array<i64: 8, 1>}, {transform_indices = @transform_2, window_bounds = array<i64: 1, 8, 128>}]} {
    %c0 = arith.constant 0 : index
    %c0_0 = arith.constant 0 : index
    %0 = vector.load %arg1[%c0, %c0_0] : memref<8x32xf32, #tpu.memory_space<vmem>>, vector<8x32xf32>
    %cst = arith.constant dense<0xFF800000> : vector<8xf32>
    %1 = vector.multi_reduction <maximumf>, %0, %cst [1] : vector<8x32xf32> to vector<8xf32>
    %2 = vector.shape_cast %1 : vector<8xf32> to vector<8x1xf32>
    %3 = vector.broadcast %2 : vector<8x1xf32> to vector<8x32xf32>
    %4 = arith.subf %0, %3 : vector<8x32xf32>
    %5 = math.exp %4 : vector<8x32xf32>
    %cst_1 = arith.constant dense<0.000000e+00> : vector<8xf32>
    %6 = vector.multi_reduction <add>, %5, %cst_1 [1] : vector<8x32xf32> to vector<8xf32>
    %7 = vector.shape_cast %6 : vector<8xf32> to vector<8x1xf32>
    %8 = tpu.reciprocal %7 : vector<8x1xf32> -> vector<8x1xf32>
    %9 = vector.broadcast %8 : vector<8x1xf32> to vector<8x32xf32>
    %10 = arith.mulf %5, %9 : vector<8x32xf32>
    %11 = math.exp %10 : vector<8x32xf32>
    %cst_2 = arith.constant dense<0.000000e+00> : vector<8xf32>
    %12 = vector.multi_reduction <add>, %11, %cst_2 [1] : vector<8x32xf32> to vector<8xf32>
    %13 = vector.shape_cast %12 : vector<8xf32> to vector<8x1xf32>
    %14 = math.log %13 : vector<8x1xf32>
    %15 = tpu.iota {dimensions = array<i32: 1>} : vector<8x32xi32>
    %c0_3 = arith.constant 0 : index
    %c0_4 = arith.constant 0 : index
    %16 = vector.load %arg2[%c0_3, %c0_4] : memref<8x1xi32, #tpu.memory_space<vmem>>, vector<8x1xi32>
    %17 = vector.broadcast %16 : vector<8x1xi32> to vector<8x32xi32>
    %18 = arith.cmpi eq, %15, %17 : vector<8x32xi32>
    %cst_5 = arith.constant 0.000000e+00 : f32
    %19 = vector.broadcast %cst_5 : f32 to vector<8x32xf32>
    %20 = arith.select %18, %10, %19 : vector<8x32xi1>, vector<8x32xf32>
    %cst_6 = arith.constant dense<0.000000e+00> : vector<8xf32>
    %21 = vector.multi_reduction <add>, %20, %cst_6 [1] : vector<8x32xf32> to vector<8xf32>
    %22 = vector.shape_cast %21 : vector<8xf32> to vector<8x1xf32>
    %23 = arith.subf %14, %22 : vector<8x1xf32>
    %c8_i32 = arith.constant 8 : i32
    %24 = arith.muli %arg0, %c8_i32 : i32
    %25 = tpu.iota {dimensions = array<i32: 0>} : vector<8x1xi32>
    %26 = vector.broadcast %24 : i32 to vector<8x1xi32>
    %27 = arith.addi %26, %25 : vector<8x1xi32>
    %c8_i32_7 = arith.constant 8 : i32
    %28 = vector.broadcast %c8_i32_7 : i32 to vector<8x1xi32>
    %29 = arith.cmpi slt, %27, %28 : vector<8x1xi32>
    %cst_8 = arith.constant 0.000000e+00 : f32
    %30 = vector.broadcast %cst_8 : f32 to vector<8x1xf32>
    %31 = arith.select %29, %23, %30 : vector<8x1xi1>, vector<8x1xf32>
    %32 = vector.shape_cast %31 : vector<8x1xf32> to vector<1x8x1xf32>
    %cst_9 = arith.constant dense<0.000000e+00> : vector<1xf32>
    %33 = vector.multi_reduction <add>, %32, %cst_9 [1, 2] : vector<1x8x1xf32> to vector<1xf32>
    %34 = vector.shape_cast %33 : vector<1xf32> to vector<1x1x1xf32>
    %35 = vector.extract %34[0, 0, 0] : f32 from vector<1x1x1xf32>
    %36 = vector.broadcast %35 : f32 to vector<1x8x128xf32>
    %c0_10 = arith.constant 0 : index
    %c0_11 = arith.constant 0 : index
    %c0_12 = arith.constant 0 : index
    %37 = vector.load %arg3[%c0_10, %c0_11, %c0_12] : memref<1x8x128xf32, #tpu.memory_space<vmem>>, vector<1x8x128xf32>
    tpu.vector_store %arg3[%c0_10, %c0_11, %c0_12], %36 {strides = array<i32>} : memref<1x8x128xf32, #tpu.memory_space<vmem>>, vector<1x8x128xf32>,
    return
  }
  func.func @transform_0(%arg0: i32) -> (i32, i32) {
    %c0_i32 = arith.constant 0 : i32
    %c0_i32_0 = arith.constant 0 : i32
    return %arg0, %c0_i32 : i32, i32
  }
  func.func @transform_1(%arg0: i32) -> (i32, i32) {
    %c0_i32 = arith.constant 0 : i32
    %c0_i32_0 = arith.constant 0 : i32
    return %arg0, %c0_i32 : i32, i32
  }
  func.func @transform_2(%arg0: i32) -> (i32, i32, i32) {
    %c0_i32 = arith.constant 0 : i32
    %c0_i32_0 = arith.constant 0 : i32
    %c0_i32_1 = arith.constant 0 : i32
    return %arg0, %c0_i32, %c0_i32_0 : i32, i32, i32
  }
}

</mosaic_0001>

<llo_original>
// kernel: tpu_custom_call.1
$region0: #{tpu_custom_call.1}
  #allocation0 [shape = 'u32[]', space=smem, size = 0x4, offset = 0x4, fixed_abs, tag = 'smem constant byte address 0x4 - core index']
  #allocation1 [shape = 'u32[144,128]{1,0:T(1,128)}', space=vmem, size = 0x12000, scoped, tag = 'internal scratch']
  %s0 = inlined_call_operand.vmem [shape: f32[8,32], index: 0, kind: input, shape index: {}]
  %s1 = inlined_call_operand.vmem [shape: s32[8,1], index: 1, kind: input, shape index: {}]
  %s2 = inlined_call_operand.hbm [shape: f32[1,8,128], index: 2, kind: output, shape index: {}]
  %s3 = sld [smem:[#allocation0]]
  $region18: #{tpu_custom_call.1} parent=0
    _
  %s5 = ssub.s32 1, %s3
  %s6 = scalar_select 0, %s5, %s3
  $region1: #{tpu_custom_call.1} parent=0
    #allocation2 [shape = 'u8[4096]{0}', space=vmem, size = 0x1000, scoped, tag = 'output window, operand 0, single buffered']
    #allocation3 [shape = 's32[1]{0}', space=sflag, size = 0x4, scoped, tag = 'scoped memory for tpu_custom_call.1']
    %7 = vsyncpa [#allocation3], 0
    // Predicated region
    $region2: #{tpu_custom_call.1} parent=1 // pred_check
      _
    $region3: #{tpu_custom_call.1} parent=1 // pred_check_branch
      %9 = sbr.rel (0) target = $region5
    $region4: #{tpu_custom_call.1} parent=1 // pred_region
      _
    $region5: #{tpu_custom_call.1} parent=1 // pred_fallthru
      _
    // Predicated region
    $region6: #{tpu_custom_call.1} parent=1 // pred_check
      _
    $region7: #{tpu_custom_call.1} parent=1 // pred_check_branch
      %11 = sbr.rel (0) target = $region9
    $region8: #{tpu_custom_call.1} parent=1 // pred_region
      _
    $region9: #{tpu_custom_call.1} parent=1 // pred_fallthru
      _
    %v12 = vld [vmem:[%s0] sm:$0xff]
    %vm13 = vcmask 261120
    %v14 = vsel %vm13, %v12, -inf
    %15 = vmax.xlane.f32.xlu0 %v14
    %v16 = vpop.xlane.xlu0 %15
    %v17 = vsub.f32 %v12, %v16
    %v18 = vmul.f32 %v17, 1.442695
    %v19 = vpow.pop %v18
    %v20 = vsel %vm13, %v19, 0.0
    %21 = vadd.xlane.f32.xlu0 %v20
    %v22 = vpop.xlane.xlu0 %21
    %v23 = vrcp.pop %v22
    %v24 = vmul.f32 %v19, %v23
    %v25 = vmul.f32 %v24, 1.442695
    %v26 = vpow.pop %v25
    %v27 = vsel %vm13, %v26, 0.0
    %28 = vadd.xlane.f32.xlu0 %v27
    %v29 = vpop.xlane.xlu0 %28
    %v30 = vlog2.pop %v29
    %v31 = vmul.f32 %v30, 0.6931472
    %v32 = vlaneseq
    %v33 = vand.u32 %v32, 127
    %v34 = vld [vmem:[%s1] sm:$0xff]
    %35 = vset.pattern.permute.xlu0 0
    %36 = vperm.xlu0 %35, %v34
    %v37 = vpop.permute.xlu0 %36
    %vm38 = vcmp.eq.s32.totalorder %v33, %v37
    %v39 = vsel %vm38, %v24, 0.0
    %v40 = vsel %vm13, %v39, 0.0
    %41 = vadd.xlane.f32.xlu0 %v40
    %v42 = vpop.xlane.xlu0 %41
    %v43 = vsub.f32 %v31, %v42
    %s44 = smul.u32 0, 8
    %v45 = vlaneseq
    %v46 = vshrl.u32 %v45, 7
    %v47 = vstv %s44
    %v48 = vadd.s32 %v47, %v46
    %vm49 = vcmp.lt.s32.totalorder %v48, 8
    %v50 = vsel %vm49, %v43, 0.0
    %vm51 = vcmask 7168
    %v52 = vsel %vm51, %v50, 0.0
    %53 = vadd.xlane.f32.xlu0 %v52
    %v54 = vpop.xlane.xlu0 %53
    %v55 = vrot.slane %v54, 4
    %v56 = vadd.f32 %v54, %v55
    %v57 = vrot.slane %v56, 2
    %v58 = vadd.f32 %v56, %v57
    %v59 = vrot.slane %v58, 1
    %v60 = vadd.f32 %v58, %v59
    %s61 = vtos %v60
    %v62 = vstv %s61
    %63 = vst [vmem:[#allocation2] sm:$0xff] %v62
    // Predicated region
    $region10: #{tpu_custom_call.1} parent=1 // pred_check
      _
    $region11: #{tpu_custom_call.1} parent=1 // pred_check_branch
      %65 = sbr.rel (0) target = $region13
    $region12: #{tpu_custom_call.1} parent=1 // pred_region
      %s67 = ssub.s32 128, 128
      %68 = vsyncadd [#allocation3], %s67
      %s70 = sshll.u32 [#allocation2], 4
      %s71 = int_to_ptr.vmem [resolvable:$true] %s70
      %73 = dma.vmem_to_hbm [thread:$0]  %s71, 128, %s2, [#allocation3]
    $region13: #{tpu_custom_call.1} parent=1 // pred_fallthru
      _
    // Predicated region
    $region14: #{tpu_custom_call.1} parent=1 // pred_check
      _
    $region15: #{tpu_custom_call.1} parent=1 // pred_check_branch
      %75 = sbr.rel (0) target = $region17
    $region16: #{tpu_custom_call.1} parent=1 // pred_region
      %76 = dma.done [#allocation3], 128
    $region17: #{tpu_custom_call.1} parent=1 // pred_fallthru
      _
    %77 = vsyncpa [#allocation3], 1

</llo_original>
